<compile_context>
chip_gen: v5e
topology: v5e:2x2
jax: 0.10.0
libtpu: 0.0.40
codegen_flags: <defaults>
</compile_context>

<pallas_src>
import jax
import jax.numpy as jnp
import numpy as np
from jax.experimental import pallas as pl
from jax.experimental.pallas import tpu as pltpu


def creat_real_dictionary(T, rr, theta):
    """JAX port of DYAN's creatRealDictionary.  Returns (T, 4*N + 1) float32."""
    rr = rr.astype(jnp.float32)
    theta = theta.astype(jnp.float32)
    i = jnp.arange(T, dtype=jnp.float32)[:, None]            # (T, 1)
    # (-rr)^i == (-1)^i * rr^i for integer i (rr initialized > 0)
    sign = jnp.where(jnp.mod(i, 2.0) == 0.0, 1.0, -1.0)      # (T, 1)
    rr_pow = jnp.power(rr[None, :], i)                       # (T, N)
    neg_rr_pow = rr_pow * sign                                # (T, N)
    cos_t = jnp.cos(i * theta[None, :])                      # (T, N)
    sin_t = jnp.sin(i * theta[None, :])                      # (T, N)
    W1 = rr_pow * cos_t
    W2 = neg_rr_pow * cos_t
    W3 = rr_pow * sin_t
    W4 = neg_rr_pow * sin_t
    ones = jnp.ones((T, 1), dtype=jnp.float32)
    dic = jnp.concatenate([ones, W1, W2, W3, W4], axis=1)     # (T, 4N+1)
    # column-wise L2 normalization (zero-norm columns -> sqrt(T), as in the ref)
    G = jnp.linalg.norm(dic, axis=0)
    G = jnp.where(G == 0.0, jnp.sqrt(jnp.float32(T)), G)
    return dic / G


def _round_up(x, m):
    return ((x + m - 1) // m) * m


def _invsc_kernel(dic_ref, x_ref, o_ref):
    # dic_ref: (Tt, K)          VMEM, shared across all grid steps (constant index_map)
    # x_ref:   (bb, K, tile_p)  VMEM, one (batch-block, lane-tile) of the codes
    # o_ref:   (bb, Tt, tile_p) VMEM, lane-dense output tile
    dic = dic_ref[...]
    bb = x_ref.shape[0]
    for i in range(bb):  # bb is small & static -> cheap unrolled loop of skinny matmuls
        o_ref[i, :, :] = jnp.dot(
            dic, x_ref[i, :, :], preferred_element_type=jnp.float32
        ).astype(o_ref.dtype)


def inv_sc_layer(x, rr, theta, T, PRE, *, max_lane_tile=16384):
    """result[b, t, p] = sum_k dic(T+PRE)[t, k] * x[b, k, p]."""
    B, K, P = x.shape
    Tt = T + PRE
    itemsize = x.dtype.itemsize
    dic = creat_real_dictionary(Tt, rr, theta)                # (Tt, K) f32, tiny

    # --- lane (P) tiling: even split into 128-multiples, <=128 wasted lanes/tile ---
    if P <= max_lane_tile:
        tile_p = P                      # full-dim block: no alignment requirement
        num_p_tiles = 1
    else:
        num_p_tiles = pl.cdiv(P, max_lane_tile)
        tile_p = _round_up(pl.cdiv(P, num_p_tiles), 128)
        num_p_tiles = pl.cdiv(P, tile_p)

    # --- batch packing: keep per-step bytes reasonable when P is small, while
    #     keeping the double-buffered VMEM footprint under ~12 MiB (v5e default
    #     scoped VMEM is 16 MiB) and the in-kernel unrolled loop short. ---
    row_bytes = (K + Tt) * tile_p * itemsize          # one batch row of x + out
    vmem_budget = 12 << 20
    bb = int(min(B, 8, max(1, vmem_budget // (2 * row_bytes))))
    num_b_tiles = pl.cdiv(B, bb)

    cost = pl.CostEstimate(
        flops=2 * B * Tt * K * P,
        transcendentals=0,
        bytes_accessed=(B * K * P + B * Tt * P) * itemsize + Tt * K * 4,
    )

    out = pl.pallas_call(
        _invsc_kernel,
        out_shape=jax.ShapeDtypeStruct((B, Tt, P), x.dtype),
        grid_spec=pl.GridSpec(
            grid=(num_b_tiles, num_p_tiles),
            in_specs=[
                # shared dictionary: constant block index -> fetched once
                pl.BlockSpec((Tt, K), lambda bi, pi: (0, 0)),
                # codes consumed in native (B, K, P) layout, K unpadded
                pl.BlockSpec((bb, K, tile_p), lambda bi, pi: (bi, 0, pi)),
            ],
            out_specs=pl.BlockSpec((bb, Tt, tile_p), lambda bi, pi: (bi, 0, pi)),
        ),
        compiler_params=pltpu.CompilerParams(
            # no reduction grid axis: both axes independent -> megacore-splittable
            dimension_semantics=("parallel", "parallel"),
        ),
        cost_estimate=cost,
    )(dic, x)
    return out


if __name__ == "__main__":
    # Small, DYAN-like sizes: N=16 poles -> K = 4*16+1 = 65, T=8, PRE=2, P=128 pixels.
    N, T, PRE = 16, 8, 2
    K = 4 * N + 1
    B, P = 2, 128

    key = jax.random.PRNGKey(0)
    k_rr, k_th, k_x = jax.random.split(key, 3)
    # deterministic "learned" pole parameters: magnitudes near 1, angles in (0, pi)
    rr = 0.9 + 0.2 * jax.random.uniform(k_rr, (N,), dtype=jnp.float32)
    theta = jnp.pi * jax.random.uniform(k_th, (N,), dtype=jnp.float32)
    # sparse code input (B, K, P)
    x = jax.random.normal(k_x, (B, K, P), dtype=jnp.float32)

    out = inv_sc_layer(x, rr, theta, T, PRE)
    out = jax.block_until_ready(out)

    # reference check in plain JAX
    dic_ref = creat_real_dictionary(T + PRE, rr, theta)
    ref = jnp.einsum("tk,bkp->btp", dic_ref, x)
    assert out.shape == (B, T + PRE, P)
    np.testing.assert_allclose(np.asarray(out), np.asarray(ref), rtol=1e-5, atol=1e-5)

    print("KERNEL_OK")
</pallas_src>

<mosaic_0001>
module attributes {stable_mosaic.version = 11 : i64} {
  func.func @_invsc_kernel(%arg0: i32, %arg1: i32, %arg2: memref<10x65xf32, #tpu.memory_space<vmem>>, %arg3: memref<2x65x128xf32, #tpu.memory_space<vmem>>, %arg4: memref<2x10x128xf32, #tpu.memory_space<vmem>>) attributes {dimension_semantics = [#tpu.dimension_semantics<parallel>, #tpu.dimension_semantics<parallel>], iteration_bounds = array<i64: 1, 1>, scalar_prefetch = 0 : i64, scratch_operands = 0 : i64, tpu.core_type = #tpu.core_type<tc>, window_params = [{pipeline_mode = #tpu.pipeline_mode<synchronous>, transform_indices = @transform_0, window_bounds = array<i64: 10, 65>}, {transform_indices = @transform_1, window_bounds = array<i64: 2, 65, 128>}, {transform_indices = @transform_2, window_bounds = array<i64: 2, 10, 128>}]} {
    %c0 = arith.constant 0 : index
    %c0_0 = arith.constant 0 : index
    %0 = vector.load %arg2[%c0, %c0_0] : memref<10x65xf32, #tpu.memory_space<vmem>>, vector<10x65xf32>
    %c0_1 = arith.constant 0 : index
    %c0_2 = arith.constant 0 : index
    %c0_3 = arith.constant 0 : index
    %1 = vector.load %arg3[%c0_1, %c0_2, %c0_3] : memref<2x65x128xf32, #tpu.memory_space<vmem>>, vector<1x65x128xf32>
    %2 = vector.shape_cast %1 : vector<1x65x128xf32> to vector<65x128xf32>
    %cst = arith.constant dense<0.000000e+00> : vector<10x128xf32>
    %3 = tpu.matmul %0, %2, %cst {dimension_numbers = #tpu.dot_dimension_numbers<[1], [0], [0], [1], [0, 0, 1, 1], [], []>} : vector<10x65xf32>, vector<65x128xf32>, vector<10x128xf32> -> vector<10x128xf32>
    %c0_4 = arith.constant 0 : index
    %c0_5 = arith.constant 0 : index
    %c0_6 = arith.constant 0 : index
    %4 = vector.load %arg4[%c0_4, %c0_5, %c0_6] : memref<2x10x128xf32, #tpu.memory_space<vmem>>, vector<1x10x128xf32>
    %5 = vector.shape_cast %4 : vector<1x10x128xf32> to vector<10x128xf32>
    %6 = vector.shape_cast %3 : vector<10x128xf32> to vector<1x10x128xf32>
    tpu.vector_store %arg4[%c0_4, %c0_5, %c0_6], %6 {strides = array<i32>} : memref<2x10x128xf32, #tpu.memory_space<vmem>>, vector<1x10x128xf32>,
    %c1 = arith.constant 1 : index
    %c0_7 = arith.constant 0 : index
    %c0_8 = arith.constant 0 : index
    %7 = vector.load %arg3[%c1, %c0_7, %c0_8] : memref<2x65x128xf32, #tpu.memory_space<vmem>>, vector<1x65x128xf32>
    %8 = vector.shape_cast %7 : vector<1x65x128xf32> to vector<65x128xf32>
    %cst_9 = arith.constant dense<0.000000e+00> : vector<10x128xf32>
    %9 = tpu.matmul %0, %8, %cst_9 {dimension_numbers = #tpu.dot_dimension_numbers<[1], [0], [0], [1], [0, 0, 1, 1], [], []>} : vector<10x65xf32>, vector<65x128xf32>, vector<10x128xf32> -> vector<10x128xf32>
    %c1_10 = arith.constant 1 : index
    %c0_11 = arith.constant 0 : index
    %c0_12 = arith.constant 0 : index
    %10 = vector.load %arg4[%c1_10, %c0_11, %c0_12] : memref<2x10x128xf32, #tpu.memory_space<vmem>>, vector<1x10x128xf32>
    %11 = vector.shape_cast %10 : vector<1x10x128xf32> to vector<10x128xf32>
    %12 = vector.shape_cast %9 : vector<10x128xf32> to vector<1x10x128xf32>
    tpu.vector_store %arg4[%c1_10, %c0_11, %c0_12], %12 {strides = array<i32>} : memref<2x10x128xf32, #tpu.memory_space<vmem>>, vector<1x10x128xf32>,
    return
  }
  func.func @transform_0(%arg0: i32, %arg1: i32) -> (i32, i32) {
    %c0_i32 = arith.constant 0 : i32
    %c0_i32_0 = arith.constant 0 : i32
    %c0_i32_1 = arith.constant 0 : i32
    return %c0_i32, %c0_i32_0 : i32, i32
  }
  func.func @transform_1(%arg0: i32, %arg1: i32) -> (i32, i32, i32) {
    %c0_i32 = arith.constant 0 : i32
    %c0_i32_0 = arith.constant 0 : i32
    return %arg0, %c0_i32, %arg1 : i32, i32, i32
  }
  func.func @transform_2(%arg0: i32, %arg1: i32) -> (i32, i32, i32) {
    %c0_i32 = arith.constant 0 : i32
    %c0_i32_0 = arith.constant 0 : i32
    return %arg0, %c0_i32, %arg1 : i32, i32, i32
  }
}

</mosaic_0001>

<llo_original>
// kernel: tpu_custom_call.1
$region0: #{tpu_custom_call.1}
  #allocation0 [shape = 'u32[]', space=smem, size = 0x4, offset = 0x4, fixed_abs, tag = 'smem constant byte address 0x4 - core index']
  #allocation1 [shape = 'u32[72,128]{1,0:T(1,128)}', space=vmem, size = 0x9000, scoped, tag = 'internal scratch']
  %s0 = inlined_call_operand.vmem [shape: f32[10,65], index: 0, kind: input, shape index: {}]
  %s1 = inlined_call_operand.vmem [shape: f32[2,65,128], index: 1, kind: input, shape index: {}]
  %s2 = inlined_call_operand.vmem [shape: f32[2,10,128], index: 2, kind: output, shape index: {}]
  %s3 = sld [smem:[#allocation0]]
  $region18: #{tpu_custom_call.1} parent=0
    _
  %s5 = ssub.s32 1, %s3
  %s6 = scalar_select 0, %s5, %s3
  // Predicated region
  $region2: #{tpu_custom_call.1} parent=0 // pred_check
    _
  $region3: #{tpu_custom_call.1} parent=0 // pred_check_branch
    %8 = sbr.rel (0) target = $region5
  $region4: #{tpu_custom_call.1} parent=0 // pred_region
    _
  $region5: #{tpu_custom_call.1} parent=0 // pred_fallthru
    _
  // Predicated region
  $region6: #{tpu_custom_call.1} parent=0 // pred_check
    _
  $region7: #{tpu_custom_call.1} parent=0 // pred_check_branch
    %10 = sbr.rel (0) target = $region9
  $region8: #{tpu_custom_call.1} parent=0 // pred_region
    _
  $region9: #{tpu_custom_call.1} parent=0 // pred_fallthru
    _
  %v11 = vld [vmem:[%s0] sm:$0xff]
  %v12 = vld [vmem:[%s0 + $0x8] sm:$0x3]
  %v13 = vld [vmem:[%s1] sm:$0xff]
  %v14 = vld [vmem:[%s1 + $0x8] sm:$0xff]
  %v15 = vld [vmem:[%s1 + $0x10] sm:$0xff]
  %v16 = vld [vmem:[%s1 + $0x18] sm:$0xff]
  %v17 = vld [vmem:[%s1 + $0x20] sm:$0xff]
  %v18 = vld [vmem:[%s1 + $0x28] sm:$0xff]
  %v19 = vld [vmem:[%s1 + $0x30] sm:$0xff]
  %v20 = vld [vmem:[%s1 + $0x38] sm:$0xff]
  %v21 = vld [vmem:[%s1 + $0x40] sm:$0x1]
  %vm22 = vcmask 531456
  %v24 = vsel %vm22, %v11, 0
  %v27 = vsel %vm22, %v12, 0
  %vm29 = vcmask 1040384
  %v31 = vsel %vm29, %v21, 0
  %33 = vmatpush.msra.mxu0 0.0
  %34 = vmatpush.msra.mxu0 0.0
  %35 = vmatpush.msra.mxu0 0.0
  %36 = vmatpush.msra.mxu0 0.0
  %37 = vmatpush.msra.mxu0 0.0
  %38 = vmatpush.msra.mxu0 0.0
  %39 = vmatpush.msra.mxu0 0.0
  %40 = vmatpush.msra.mxu0 %v31
  %41 = vmatpush.msra.mxu0 %v20
  %42 = vmatpush.msra.mxu0 %v19
  %43 = vmatpush.msra.mxu0 %v18
  %44 = vmatpush.msra.mxu0 %v17
  %45 = vmatpush.msra.mxu0 %v16
  %46 = vmatpush.msra.mxu0 %v15
  %47 = vmatpush.msra.mxu0 %v14
  %48 = vmatpush.msra.mxu0 %v13
  %49 = vmatmul.f32.gmra.mxu0 %v24
  %v50 = vpop.f32.mrf.mxu0
  %v51 = vadd.f32 0.0, %v50
  %52 = vmatmul.f32.gmra.mxu0 %v27
  %v53 = vpop.f32.mrf.mxu0
  %v54 = vadd.f32 0.0, %v53
  %55 = vdwg.mxu0
  %56 = vst [vmem:[%s2] sm:$0xff] %v51
  %57 = vst [vmem:[%s2 + $0x8] sm:$0x3] %v54
  %s58 = scalar_lea.vmem %s1, 72
  %v59 = vld [vmem:[%s58] sm:$0xff]
  %v60 = vld [vmem:[%s58 + $0x8] sm:$0xff]
  %v61 = vld [vmem:[%s58 + $0x10] sm:$0xff]
  %v62 = vld [vmem:[%s58 + $0x18] sm:$0xff]
  %v63 = vld [vmem:[%s58 + $0x20] sm:$0xff]
  %v64 = vld [vmem:[%s58 + $0x28] sm:$0xff]
  %v65 = vld [vmem:[%s58 + $0x30] sm:$0xff]
  %v66 = vld [vmem:[%s58 + $0x38] sm:$0xff]
  %v67 = vld [vmem:[%s58 + $0x40] sm:$0x1]
  %v69 = vsel %vm29, %v67, 0
  %71 = vmatpush.msra.mxu0 0.0
  %72 = vmatpush.msra.mxu0 0.0
  %73 = vmatpush.msra.mxu0 0.0
  %74 = vmatpush.msra.mxu0 0.0
  %75 = vmatpush.msra.mxu0 0.0
  %76 = vmatpush.msra.mxu0 0.0
  %77 = vmatpush.msra.mxu0 0.0
  %78 = vmatpush.msra.mxu0 %v69
  %79 = vmatpush.msra.mxu0 %v66
  %80 = vmatpush.msra.mxu0 %v65
  %81 = vmatpush.msra.mxu0 %v64
  %82 = vmatpush.msra.mxu0 %v63
  %83 = vmatpush.msra.mxu0 %v62
  %84 = vmatpush.msra.mxu0 %v61
  %85 = vmatpush.msra.mxu0 %v60
  %86 = vmatpush.msra.mxu0 %v59
  %87 = vmatmul.f32.gmra.mxu0 %v24
  %v88 = vpop.f32.mrf.mxu0
  %v89 = vadd.f32 0.0, %v88
  %90 = vmatmul.f32.gmra.mxu0 %v27
  %v91 = vpop.f32.mrf.mxu0
  %v92 = vadd.f32 0.0, %v91
  %93 = vdwg.mxu0
  %s94 = scalar_lea.vmem %s2, 16
  %95 = vst [vmem:[%s94] sm:$0xff] %v89
  %96 = vst [vmem:[%s94 + $0x8] sm:$0x3] %v92
  // Predicated region
  $region10: #{tpu_custom_call.1} parent=0 // pred_check
    _
  $region11: #{tpu_custom_call.1} parent=0 // pred_check_branch
    %98 = sbr.rel (0) target = $region13
  $region12: #{tpu_custom_call.1} parent=0 // pred_region
    _
  $region13: #{tpu_custom_call.1} parent=0 // pred_fallthru
    _
  // Predicated region
  $region14: #{tpu_custom_call.1} parent=0 // pred_check
    _
  $region15: #{tpu_custom_call.1} parent=0 // pred_check_branch
    %100 = sbr.rel (0) target = $region17
  $region16: #{tpu_custom_call.1} parent=0 // pred_region
    _
  $region17: #{tpu_custom_call.1} parent=0 // pred_fallthru
    _

</llo_original>
